<compile_context>
chip_gen: v5e
topology: v5e:2x2
jax: 0.10.0
libtpu: 0.0.40
codegen_flags: <defaults>
</compile_context>

<pallas_src>
import functools
import math

import jax
import jax.numpy as jnp
from jax.experimental import pallas as pl
from jax.experimental.pallas import tpu as pltpu

LN_EPS = 1e-5  # PyTorch nn.LayerNorm default
_INV_SQRT2 = 1.0 / math.sqrt(2.0)


def _round_up(n, m):
    return ((n + m - 1) // m) * m


def _vmem_capacity_bytes():
    try:
        return int(pltpu.get_tpu_info().vmem_capacity_bytes)
    except Exception:
        return 64 << 20  # conservative (v7x-sized) assumption


def _pick_tm(n_rows, tm_max):
    """Row tile: big for MXU efficiency, adaptive to keep padded-row waste small."""
    n8 = _round_up(max(n_rows, 1), 8)
    cands = [c for c in (1024, 512, 256, 128, 64, 32, 16, 8) if c <= max(tm_max, 8)]
    if not cands:
        cands = [8]
    if n8 <= cands[0]:
        return n8                      # whole problem in one tile, minimal padding
    for c in cands:
        waste = _round_up(n_rows, c) - n_rows
        if waste * 16 <= n_rows:       # <= ~6.25% padded-row waste
            return c
    return min(cands[0], n8)


def ffn_kernel(x_ref, g_ref, b_ref, w1_ref, b1_ref, w2_ref, b2_ref, o_ref,
               *, inv_d, d_real, mask_lanes, approx_gelu):
    # x_ref: (TM, Dp) tile of token rows; padded feature lanes of x, gamma, beta
    # and padded weight rows/cols are all zero, so padding never contributes.
    x = x_ref[...].astype(jnp.float32)

    # --- LayerNorm: two-pass stats (mean, then centered variance) ---
    mu = jnp.sum(x, axis=-1, keepdims=True) * inv_d
    xc = x - mu
    if mask_lanes:
        lane = jax.lax.broadcasted_iota(jnp.int32, xc.shape, 1)
        xc_var = jnp.where(lane < d_real, xc, 0.0)   # padded lanes hold -mu; mask them
    else:
        xc_var = xc
    var = jnp.sum(xc_var * xc_var, axis=-1, keepdims=True) * inv_d
    xn = xc * jax.lax.rsqrt(var + LN_EPS)
    # Padded gamma/beta lanes are zero -> padded xn columns become exactly 0.
    xn = xn * g_ref[...].astype(jnp.float32) + b_ref[...].astype(jnp.float32)

    # --- Linear(dim -> hidden): bf16 operands on the MXU, f32 accumulation ---
    h = jnp.dot(xn.astype(w1_ref.dtype), w1_ref[...],
                preferred_element_type=jnp.float32)
    h = h + b1_ref[...].astype(jnp.float32)

    # --- GELU ---
    if approx_gelu:
        # tanh form (EUP path); numerics differ slightly from nn.GELU() exact.
        c = math.sqrt(2.0 / math.pi)
        h = 0.5 * h * (1.0 + jnp.tanh(c * (h + 0.044715 * h * h * h)))
    else:
        # exact erf form, matching nn.GELU() default
        h = 0.5 * h * (1.0 + jax.lax.erf(h * _INV_SQRT2))

    # Dropout(p=0.0) is identity (eval / p == 0).
    # TODO(synk): training-mode dropout (p>0) needs pltpu.prng_seed + prng_random_bits.

    # --- Linear(hidden -> dim): bf16 operands, f32 accumulation ---
    y = jnp.dot(h.astype(w2_ref.dtype), w2_ref[...],
                preferred_element_type=jnp.float32)
    y = y + b2_ref[...].astype(jnp.float32)

    o_ref[...] = y.astype(o_ref.dtype)


def prepare_params(params, *, weight_dtype=jnp.bfloat16):
    """One-time per-model pad (lane-dense, 128-multiples) + bf16 cast.

    Hoisted out of feed_forward so the full-weight HBM read/write of the
    pad+convert is not paid on every call.
    """
    D, H = params["w1"].shape
    Dp, Hp = _round_up(D, 128), _round_up(H, 128)
    prepped = {
        "ln_g": jnp.pad(params["ln_g"].astype(jnp.float32), ((0, 0), (0, Dp - D))),
        "ln_b": jnp.pad(params["ln_b"].astype(jnp.float32), ((0, 0), (0, Dp - D))),
        "w1": jnp.pad(params["w1"], ((0, Dp - D), (0, Hp - H))).astype(weight_dtype),
        "b1": jnp.pad(params["b1"].astype(jnp.float32), ((0, 0), (0, Hp - H))),
        "w2": jnp.pad(params["w2"], ((0, Hp - H), (0, Dp - D))).astype(weight_dtype),
        "b2": jnp.pad(params["b2"].astype(jnp.float32), ((0, 0), (0, Dp - D))),
    }
    meta = {"D": D, "H": H, "Dp": Dp, "Hp": Hp}
    return prepped, meta


# Discovered on first call: whether this JAX build accepts pl.Buffered(1) for
# the constant-index param specs.
_SINGLE_BUFFER_PARAMS_OK = None


def _ffn_pallas_call(x2d, p, meta, *, tm, grid_rows, vmem_limit, single_buffer,
                     approx_gelu, out_dtype):
    D, Dp, Hp = meta["D"], meta["Dp"], meta["Hp"]

    kernel = functools.partial(
        ffn_kernel, inv_d=1.0 / D, d_real=D, mask_lanes=(Dp != D),
        approx_gelu=approx_gelu)

    def param_spec(shape):
        # Constant index_map -> the block is never re-fetched; Buffered(1) avoids
        # the default double-buffer and halves resident-weight VMEM.
        if single_buffer:
            return pl.BlockSpec(shape, lambda i: (0, 0),
                                pipeline_mode=pl.Buffered(1))
        return pl.BlockSpec(shape, lambda i: (0, 0))

    return pl.pallas_call(
        kernel,
        out_shape=jax.ShapeDtypeStruct((grid_rows * tm, Dp), out_dtype),
        grid_spec=pltpu.PrefetchScalarGridSpec(
            num_scalar_prefetch=0,
            grid=(grid_rows,),
            in_specs=[
                pl.BlockSpec((tm, Dp), lambda i: (i, 0)),   # x rows (pipelined)
                param_spec((1, Dp)),                        # ln gamma
                param_spec((1, Dp)),                        # ln beta
                param_spec((Dp, Hp)),                       # W1 (dim -> hidden), bf16
                param_spec((1, Hp)),                        # b1
                param_spec((Hp, Dp)),                       # W2 (hidden -> dim), bf16
                param_spec((1, Dp)),                        # b2
            ],
            out_specs=pl.BlockSpec((tm, Dp), lambda i: (i, 0)),
        ),
        compiler_params=pltpu.CompilerParams(
            dimension_semantics=("parallel",),   # shard row grid across TCs (v7x)
            vmem_limit_bytes=vmem_limit),
    )(x2d, p["ln_g"], p["ln_b"], p["w1"], p["b1"], p["w2"], p["b2"])


def feed_forward(x, prepped, meta, *, tm=None, approx_gelu=False):
    """x: (B, S, D) float32. prepped/meta from prepare_params()."""
    global _SINGLE_BUFFER_PARAMS_OK
    B, S, D_in = x.shape
    D, H, Dp, Hp = meta["D"], meta["H"], meta["Dp"], meta["Hp"]
    assert D_in == D, "input feature dim must match the prepared params"
    N = B * S

    # Generation-aware VMEM budget: 75% of reported capacity as the hard cap
    # (leaves headroom for compiler scratch / spills, esp. on v7x's 64 MiB).
    vmem_cap = _vmem_capacity_bytes()
    usable = (vmem_cap * 3) // 4

    # Row-tile cap: 512 on 128 MiB parts (v5e/v6e), 256 on 64 MiB-class parts.
    tm_max = tm if tm is not None else (512 if vmem_cap > (64 << 20) else 256)
    tm = _pick_tm(N, tm_max)
    Np = _round_up(N, tm)
    grid_rows = Np // tm

    x2d = x.reshape(N, D).astype(jnp.float32)
    needs_pad = (Np != N) or (Dp != D)
    if needs_pad:
        x2d = jnp.pad(x2d, ((0, Np - N), (0, Dp - D)))

    # Conservative VMEM estimate (assumes double-buffered params as worst case).
    vmem_bytes = (2 * tm * Dp * 4                 # x tiles (double-buffered)
                  + 2 * tm * Dp * 4               # out tiles
                  + 2 * (Dp * Hp + Hp * Dp) * 2   # bf16 W1/W2
                  + 2 * (3 * Dp + Hp) * 4         # ln gamma/beta + biases
                  + 2 * tm * Hp * 4)              # hidden intermediate headroom
    vmem_limit = int(max(min(vmem_bytes, usable), 4 << 20))

    call = functools.partial(
        _ffn_pallas_call, x2d, prepped, meta, tm=tm, grid_rows=grid_rows,
        vmem_limit=vmem_limit, approx_gelu=approx_gelu, out_dtype=x.dtype)

    if _SINGLE_BUFFER_PARAMS_OK is None:
        try:
            out = call(single_buffer=True)
            jax.block_until_ready(out)
            _SINGLE_BUFFER_PARAMS_OK = True
        except Exception:
            _SINGLE_BUFFER_PARAMS_OK = False
            out = call(single_buffer=False)
    else:
        out = call(single_buffer=_SINGLE_BUFFER_PARAMS_OK)

    if needs_pad:
        out = out[:N, :D]
    return out.reshape(B, S, D)


def init_params(key, dim, hidden_dim):
    """Deterministic init mimicking PyTorch defaults (Kaiming-uniform-ish), f32."""
    k1, k2, k3, k4 = jax.random.split(key, 4)
    bound1 = 1.0 / math.sqrt(dim)
    bound2 = 1.0 / math.sqrt(hidden_dim)
    return {
        "ln_g": jnp.ones((1, dim), jnp.float32),
        "ln_b": jnp.zeros((1, dim), jnp.float32),
        # stored already transposed for x @ W layout
        "w1": jax.random.uniform(k1, (dim, hidden_dim), jnp.float32, -bound1, bound1),
        "b1": jax.random.uniform(k2, (1, hidden_dim), jnp.float32, -bound1, bound1),
        "w2": jax.random.uniform(k3, (hidden_dim, dim), jnp.float32, -bound2, bound2),
        "b2": jax.random.uniform(k4, (1, dim), jnp.float32, -bound2, bound2),
    }


def feed_forward_ref(x, p):
    """Pure-JAX f32 reference for correctness check."""
    mu = jnp.mean(x, axis=-1, keepdims=True)
    var = jnp.mean((x - mu) ** 2, axis=-1, keepdims=True)
    xn = (x - mu) / jnp.sqrt(var + LN_EPS)
    xn = xn * p["ln_g"][0] + p["ln_b"][0]
    h = xn @ p["w1"] + p["b1"][0]
    h = 0.5 * h * (1.0 + jax.lax.erf(h / math.sqrt(2.0)))
    return h @ p["w2"] + p["b2"][0]


if __name__ == "__main__":
    key = jax.random.PRNGKey(0)
    kx, kp = jax.random.split(key)

    B, S, D, H = 2, 8, 32, 64   # batch=2, seq=8, dim=32, hidden_dim=64
    x = jax.random.normal(kx, (B, S, D), jnp.float32)
    params = init_params(kp, D, H)

    prepped, meta = prepare_params(params)   # one-time pad + bf16 cast (hoisted)

    y = feed_forward(x, prepped, meta)
    y = jax.block_until_ready(y)

    y_ref = feed_forward_ref(x, params)
    assert y.shape == (B, S, D)
    # bf16 MXU operands with f32 accumulation -> slightly looser tolerance vs f32 ref
    assert jnp.allclose(y, y_ref, atol=5e-2, rtol=5e-2), "mismatch vs reference"

    print("KERNEL_OK")
</pallas_src>

<mosaic_0001>
module attributes {stable_mosaic.version = 11 : i64} {
  func.func @ffn_kernel(%arg0: i32, %arg1: memref<16x128xf32, #tpu.memory_space<vmem>>, %arg2: memref<1x128xf32, #tpu.memory_space<vmem>>, %arg3: memref<1x128xf32, #tpu.memory_space<vmem>>, %arg4: memref<128x128xbf16, #tpu.memory_space<vmem>>, %arg5: memref<1x128xf32, #tpu.memory_space<vmem>>, %arg6: memref<128x128xbf16, #tpu.memory_space<vmem>>, %arg7: memref<1x128xf32, #tpu.memory_space<vmem>>, %arg8: memref<16x128xf32, #tpu.memory_space<vmem>>) attributes {dimension_semantics = [#tpu.dimension_semantics<parallel>], iteration_bounds = array<i64: 1>, scalar_prefetch = 0 : i64, scratch_operands = 0 : i64, tpu.core_type = #tpu.core_type<tc>, window_params = [{transform_indices = @transform_0, window_bounds = array<i64: 16, 128>}, {pipeline_mode = #tpu.pipeline_mode<synchronous>, transform_indices = @transform_1, window_bounds = array<i64: 1, 128>}, {pipeline_mode = #tpu.pipeline_mode<synchronous>, transform_indices = @transform_2, window_bounds = array<i64: 1, 128>}, {pipeline_mode = #tpu.pipeline_mode<synchronous>, transform_indices = @transform_3, window_bounds = array<i64: 128, 128>}, {pipeline_mode = #tpu.pipeline_mode<synchronous>, transform_indices = @transform_4, window_bounds = array<i64: 1, 128>}, {pipeline_mode = #tpu.pipeline_mode<synchronous>, transform_indices = @transform_5, window_bounds = array<i64: 128, 128>}, {pipeline_mode = #tpu.pipeline_mode<synchronous>, transform_indices = @transform_6, window_bounds = array<i64: 1, 128>}, {transform_indices = @transform_7, window_bounds = array<i64: 16, 128>}]} {
    %c0 = arith.constant 0 : index
    %c0_0 = arith.constant 0 : index
    %0 = vector.load %arg1[%c0, %c0_0] : memref<16x128xf32, #tpu.memory_space<vmem>>, vector<16x128xf32>
    %cst = arith.constant dense<0.000000e+00> : vector<16xf32>
    %1 = vector.multi_reduction <add>, %0, %cst [1] : vector<16x128xf32> to vector<16xf32>
    %2 = vector.shape_cast %1 : vector<16xf32> to vector<16x1xf32>
    %cst_1 = arith.constant 3.125000e-02 : f32
    %3 = vector.broadcast %cst_1 : f32 to vector<16x1xf32>
    %4 = arith.mulf %2, %3 : vector<16x1xf32>
    %5 = vector.broadcast %4 : vector<16x1xf32> to vector<16x128xf32>
    %6 = arith.subf %0, %5 : vector<16x128xf32>
    %7 = tpu.iota {dimensions = array<i32: 1>} : vector<16x128xi32>
    %c32_i32 = arith.constant 32 : i32
    %8 = vector.broadcast %c32_i32 : i32 to vector<16x128xi32>
    %9 = arith.cmpi slt, %7, %8 : vector<16x128xi32>
    %cst_2 = arith.constant 0.000000e+00 : f32
    %10 = vector.broadcast %cst_2 : f32 to vector<16x128xf32>
    %11 = arith.select %9, %6, %10 : vector<16x128xi1>, vector<16x128xf32>
    %12 = arith.mulf %11, %11 : vector<16x128xf32>
    %cst_3 = arith.constant dense<0.000000e+00> : vector<16xf32>
    %13 = vector.multi_reduction <add>, %12, %cst_3 [1] : vector<16x128xf32> to vector<16xf32>
    %14 = vector.shape_cast %13 : vector<16xf32> to vector<16x1xf32>
    %cst_4 = arith.constant 3.125000e-02 : f32
    %15 = vector.broadcast %cst_4 : f32 to vector<16x1xf32>
    %16 = arith.mulf %14, %15 : vector<16x1xf32>
    %cst_5 = arith.constant 9.99999974E-6 : f32
    %17 = vector.broadcast %cst_5 : f32 to vector<16x1xf32>
    %18 = arith.addf %16, %17 : vector<16x1xf32>
    %19 = math.rsqrt %18 : vector<16x1xf32>
    %20 = vector.broadcast %19 : vector<16x1xf32> to vector<16x128xf32>
    %21 = arith.mulf %6, %20 : vector<16x128xf32>
    %c0_6 = arith.constant 0 : index
    %c0_7 = arith.constant 0 : index
    %22 = vector.load %arg2[%c0_6, %c0_7] : memref<1x128xf32, #tpu.memory_space<vmem>>, vector<1x128xf32>
    %23 = vector.broadcast %22 : vector<1x128xf32> to vector<16x128xf32>
    %24 = arith.mulf %21, %23 : vector<16x128xf32>
    %c0_8 = arith.constant 0 : index
    %c0_9 = arith.constant 0 : index
    %25 = vector.load %arg3[%c0_8, %c0_9] : memref<1x128xf32, #tpu.memory_space<vmem>>, vector<1x128xf32>
    %26 = vector.broadcast %25 : vector<1x128xf32> to vector<16x128xf32>
    %27 = arith.addf %24, %26 : vector<16x128xf32>
    %28 = arith.truncf %27 : vector<16x128xf32> to vector<16x128xbf16>
    %c0_10 = arith.constant 0 : index
    %c0_11 = arith.constant 0 : index
    %29 = vector.load %arg4[%c0_10, %c0_11] : memref<128x128xbf16, #tpu.memory_space<vmem>>, vector<128x128xbf16>
    %cst_12 = arith.constant dense<0.000000e+00> : vector<16x128xf32>
    %30 = tpu.matmul %28, %29, %cst_12 {dimension_numbers = #tpu.dot_dimension_numbers<[1], [0], [0], [1], [0, 0, 1, 1], [], []>} : vector<16x128xbf16>, vector<128x128xbf16>, vector<16x128xf32> -> vector<16x128xf32>
    %c0_13 = arith.constant 0 : index
    %c0_14 = arith.constant 0 : index
    %31 = vector.load %arg5[%c0_13, %c0_14] : memref<1x128xf32, #tpu.memory_space<vmem>>, vector<1x128xf32>
    %32 = vector.broadcast %31 : vector<1x128xf32> to vector<16x128xf32>
    %33 = arith.addf %30, %32 : vector<16x128xf32>
    %cst_15 = arith.constant 5.000000e-01 : f32
    %34 = vector.broadcast %cst_15 : f32 to vector<16x128xf32>
    %35 = arith.mulf %34, %33 : vector<16x128xf32>
    %cst_16 = arith.constant 0.707106769 : f32
    %36 = vector.broadcast %cst_16 : f32 to vector<16x128xf32>
    %37 = arith.mulf %33, %36 : vector<16x128xf32>
    %38 = math.erf %37 : vector<16x128xf32>
    %cst_17 = arith.constant 1.000000e+00 : f32
    %39 = vector.broadcast %cst_17 : f32 to vector<16x128xf32>
    %40 = arith.addf %39, %38 : vector<16x128xf32>
    %41 = arith.mulf %35, %40 : vector<16x128xf32>
    %42 = arith.truncf %41 : vector<16x128xf32> to vector<16x128xbf16>
    %c0_18 = arith.constant 0 : index
    %c0_19 = arith.constant 0 : index
    %43 = vector.load %arg6[%c0_18, %c0_19] : memref<128x128xbf16, #tpu.memory_space<vmem>>, vector<128x128xbf16>
    %cst_20 = arith.constant dense<0.000000e+00> : vector<16x128xf32>
    %44 = tpu.matmul %42, %43, %cst_20 {dimension_numbers = #tpu.dot_dimension_numbers<[1], [0], [0], [1], [0, 0, 1, 1], [], []>} : vector<16x128xbf16>, vector<128x128xbf16>, vector<16x128xf32> -> vector<16x128xf32>
    %c0_21 = arith.constant 0 : index
    %c0_22 = arith.constant 0 : index
    %45 = vector.load %arg7[%c0_21, %c0_22] : memref<1x128xf32, #tpu.memory_space<vmem>>, vector<1x128xf32>
    %46 = vector.broadcast %45 : vector<1x128xf32> to vector<16x128xf32>
    %47 = arith.addf %44, %46 : vector<16x128xf32>
    %c0_23 = arith.constant 0 : index
    %c0_24 = arith.constant 0 : index
    %48 = vector.load %arg8[%c0_23, %c0_24] : memref<16x128xf32, #tpu.memory_space<vmem>>, vector<16x128xf32>
    tpu.vector_store %arg8[%c0_23, %c0_24], %47 {strides = array<i32>} : memref<16x128xf32, #tpu.memory_space<vmem>>, vector<16x128xf32>,
    return
  }
  func.func @transform_0(%arg0: i32) -> (i32, i32) {
    %c0_i32 = arith.constant 0 : i32
    %c0_i32_0 = arith.constant 0 : i32
    return %arg0, %c0_i32 : i32, i32
  }
  func.func @transform_1(%arg0: i32) -> (i32, i32) {
    %c0_i32 = arith.constant 0 : i32
    %c0_i32_0 = arith.constant 0 : i32
    %c0_i32_1 = arith.constant 0 : i32
    return %c0_i32, %c0_i32_0 : i32, i32
  }
  func.func @transform_2(%arg0: i32) -> (i32, i32) {
    %c0_i32 = arith.constant 0 : i32
    %c0_i32_0 = arith.constant 0 : i32
    %c0_i32_1 = arith.constant 0 : i32
    return %c0_i32, %c0_i32_0 : i32, i32
  }
  func.func @transform_3(%arg0: i32) -> (i32, i32) {
    %c0_i32 = arith.constant 0 : i32
    %c0_i32_0 = arith.constant 0 : i32
    %c0_i32_1 = arith.constant 0 : i32
    return %c0_i32, %c0_i32_0 : i32, i32
  }
  func.func @transform_4(%arg0: i32) -> (i32, i32) {
    %c0_i32 = arith.constant 0 : i32
    %c0_i32_0 = arith.constant 0 : i32
    %c0_i32_1 = arith.constant 0 : i32
    return %c0_i32, %c0_i32_0 : i32, i32
  }
  func.func @transform_5(%arg0: i32) -> (i32, i32) {
    %c0_i32 = arith.constant 0 : i32
    %c0_i32_0 = arith.constant 0 : i32
    %c0_i32_1 = arith.constant 0 : i32
    return %c0_i32, %c0_i32_0 : i32, i32
  }
  func.func @transform_6(%arg0: i32) -> (i32, i32) {
    %c0_i32 = arith.constant 0 : i32
    %c0_i32_0 = arith.constant 0 : i32
    %c0_i32_1 = arith.constant 0 : i32
    return %c0_i32, %c0_i32_0 : i32, i32
  }
  func.func @transform_7(%arg0: i32) -> (i32, i32) {
    %c0_i32 = arith.constant 0 : i32
    %c0_i32_0 = arith.constant 0 : i32
    return %arg0, %c0_i32 : i32, i32
  }
}

module attributes {stable_mosaic.version = 11 : i64} {
  func.func @ffn_kernel(%arg0: i32, %arg1: memref<16x128xf32, #tpu.memory_space<vmem>>, %arg2: memref<1x128xf32, #tpu.memory_space<vmem>>, %arg3: memref<1x128xf32, #tpu.memory_space<vmem>>, %arg4: memref<128x128xbf16, #tpu.memory_space<vmem>>, %arg5: memref<1x128xf32, #tpu.memory_space<vmem>>, %arg6: memref<128x128xbf16, #tpu.memory_space<vmem>>, %arg7: memref<1x128xf32, #tpu.memory_space<vmem>>, %arg8: memref<16x128xf32, #tpu.memory_space<vmem>>) attributes {dimension_semantics = [#tpu.dimension_semantics<parallel>], iteration_bounds = array<i64: 1>, scalar_prefetch = 0 : i64, scratch_operands = 0 : i64, tpu.core_type = #tpu.core_type<tc>, window_params = [{transform_indices = @transform_0, window_bounds = array<i64: 16, 128>}, {pipeline_mode = #tpu.pipeline_mode<synchronous>, transform_indices = @transform_1, window_bounds = array<i64: 1, 128>}, {pipeline_mode = #tpu.pipeline_mode<synchronous>, transform_indices = @transform_2, window_bounds = array<i64: 1, 128>}, {pipeline_mode = #tpu.pipeline_mode<synchronous>, transform_indices = @transform_3, window_bounds = array<i64: 128, 128>}, {pipeline_mode = #tpu.pipeline_mode<synchronous>, transform_indices = @transform_4, window_bounds = array<i64: 1, 128>}, {pipeline_mode = #tpu.pipeline_mode<synchronous>, transform_indices = @transform_5, window_bounds = array<i64: 128, 128>}, {pipeline_mode = #tpu.pipeline_mode<synchronous>, transform_indices = @transform_6, window_bounds = array<i64: 1, 128>}, {transform_indices = @transform_7, window_bounds = array<i64: 16, 128>}]} {
    %c0 = arith.constant 0 : index
    %c0_0 = arith.constant 0 : index
    %0 = vector.load %arg1[%c0, %c0_0] : memref<16x128xf32, #tpu.memory_space<vmem>>, vector<16x128xf32>
    %cst = arith.constant dense<0.000000e+00> : vector<16xf32>
    %1 = vector.multi_reduction <add>, %0, %cst [1] : vector<16x128xf32> to vector<16xf32>
    %2 = vector.shape_cast %1 : vector<16xf32> to vector<16x1xf32>
    %cst_1 = arith.constant 3.125000e-02 : f32
    %3 = vector.broadcast %cst_1 : f32 to vector<16x1xf32>
    %4 = arith.mulf %2, %3 : vector<16x1xf32>
    %5 = vector.broadcast %4 : vector<16x1xf32> to vector<16x128xf32>
    %6 = arith.subf %0, %5 : vector<16x128xf32>
    %7 = tpu.iota {dimensions = array<i32: 1>} : vector<16x128xi32>
    %c32_i32 = arith.constant 32 : i32
    %8 = vector.broadcast %c32_i32 : i32 to vector<16x128xi32>
    %9 = arith.cmpi slt, %7, %8 : vector<16x128xi32>
    %cst_2 = arith.constant 0.000000e+00 : f32
    %10 = vector.broadcast %cst_2 : f32 to vector<16x128xf32>
    %11 = arith.select %9, %6, %10 : vector<16x128xi1>, vector<16x128xf32>
    %12 = arith.mulf %11, %11 : vector<16x128xf32>
    %cst_3 = arith.constant dense<0.000000e+00> : vector<16xf32>
    %13 = vector.multi_reduction <add>, %12, %cst_3 [1] : vector<16x128xf32> to vector<16xf32>
    %14 = vector.shape_cast %13 : vector<16xf32> to vector<16x1xf32>
    %cst_4 = arith.constant 3.125000e-02 : f32
    %15 = vector.broadcast %cst_4 : f32 to vector<16x1xf32>
    %16 = arith.mulf %14, %15 : vector<16x1xf32>
    %cst_5 = arith.constant 9.99999974E-6 : f32
    %17 = vector.broadcast %cst_5 : f32 to vector<16x1xf32>
    %18 = arith.addf %16, %17 : vector<16x1xf32>
    %19 = math.rsqrt %18 : vector<16x1xf32>
    %20 = vector.broadcast %19 : vector<16x1xf32> to vector<16x128xf32>
    %21 = arith.mulf %6, %20 : vector<16x128xf32>
    %c0_6 = arith.constant 0 : index
    %c0_7 = arith.constant 0 : index
    %22 = vector.load %arg2[%c0_6, %c0_7] : memref<1x128xf32, #tpu.memory_space<vmem>>, vector<1x128xf32>
    %23 = vector.broadcast %22 : vector<1x128xf32> to vector<16x128xf32>
    %24 = arith.mulf %21, %23 : vector<16x128xf32>
    %c0_8 = arith.constant 0 : index
    %c0_9 = arith.constant 0 : index
    %25 = vector.load %arg3[%c0_8, %c0_9] : memref<1x128xf32, #tpu.memory_space<vmem>>, vector<1x128xf32>
    %26 = vector.broadcast %25 : vector<1x128xf32> to vector<16x128xf32>
    %27 = arith.addf %24, %26 : vector<16x128xf32>
    %28 = arith.truncf %27 : vector<16x128xf32> to vector<16x128xbf16>
    %c0_10 = arith.constant 0 : index
    %c0_11 = arith.constant 0 : index
    %29 = vector.load %arg4[%c0_10, %c0_11] : memref<128x128xbf16, #tpu.memory_space<vmem>>, vector<128x128xbf16>
    %cst_12 = arith.constant dense<0.000000e+00> : vector<16x128xf32>
    %30 = tpu.matmul %28, %29, %cst_12 {dimension_numbers = #tpu.dot_dimension_numbers<[1], [0], [0], [1], [0, 0, 1, 1], [], []>} : vector<16x128xbf16>, vector<128x128xbf16>, vector<16x128xf32> -> vector<16x128xf32>
    %c0_13 = arith.constant 0 : index
    %c0_14 = arith.constant 0 : index
    %31 = vector.load %arg5[%c0_13, %c0_14] : memref<1x128xf32, #tpu.memory_space<vmem>>, vector<1x128xf32>
    %32 = vector.broadcast %31 : vector<1x128xf32> to vector<16x128xf32>
    %33 = arith.addf %30, %32 : vector<16x128xf32>
    %cst_15 = arith.constant 5.000000e-01 : f32
    %34 = vector.broadcast %cst_15 : f32 to vector<16x128xf32>
    %35 = arith.mulf %34, %33 : vector<16x128xf32>
    %cst_16 = arith.constant 0.707106769 : f32
    %36 = vector.broadcast %cst_16 : f32 to vector<16x128xf32>
    %37 = arith.mulf %33, %36 : vector<16x128xf32>
    %38 = math.erf %37 : vector<16x128xf32>
    %cst_17 = arith.constant 1.000000e+00 : f32
    %39 = vector.broadcast %cst_17 : f32 to vector<16x128xf32>
    %40 = arith.addf %39, %38 : vector<16x128xf32>
    %41 = arith.mulf %35, %40 : vector<16x128xf32>
    %42 = arith.truncf %41 : vector<16x128xf32> to vector<16x128xbf16>
    %c0_18 = arith.constant 0 : index
    %c0_19 = arith.constant 0 : index
    %43 = vector.load %arg6[%c0_18, %c0_19] : memref<128x128xbf16, #tpu.memory_space<vmem>>, vector<128x128xbf16>
    %cst_20 = arith.constant dense<0.000000e+00> : vector<16x128xf32>
    %44 = tpu.matmul %42, %43, %cst_20 {dimension_numbers = #tpu.dot_dimension_numbers<[1], [0], [0], [1], [0, 0, 1, 1], [], []>} : vector<16x128xbf16>, vector<128x128xbf16>, vector<16x128xf32> -> vector<16x128xf32>
    %c0_21 = arith.constant 0 : index
    %c0_22 = arith.constant 0 : index
    %45 = vector.load %arg7[%c0_21, %c0_22] : memref<1x128xf32, #tpu.memory_space<vmem>>, vector<1x128xf32>
    %46 = vector.broadcast %45 : vector<1x128xf32> to vector<16x128xf32>
    %47 = arith.addf %44, %46 : vector<16x128xf32>
    %c0_23 = arith.constant 0 : index
    %c0_24 = arith.constant 0 : index
    %48 = vector.load %arg8[%c0_23, %c0_24] : memref<16x128xf32, #tpu.memory_space<vmem>>, vector<16x128xf32>
    tpu.vector_store %arg8[%c0_23, %c0_24], %47 {strides = array<i32>} : memref<16x128xf32, #tpu.memory_space<vmem>>, vector<16x128xf32>,
    return
  }
  func.func @transform_0(%arg0: i32) -> (i32, i32) {
    %c0_i32 = arith.constant 0 : i32
    %c0_i32_0 = arith.constant 0 : i32
    return %arg0, %c0_i32 : i32, i32
  }
  func.func @transform_1(%arg0: i32) -> (i32, i32) {
    %c0_i32 = arith.constant 0 : i32
    %c0_i32_0 = arith.constant 0 : i32
    %c0_i32_1 = arith.constant 0 : i32
    return %c0_i32, %c0_i32_0 : i32, i32
  }
  func.func @transform_2(%arg0: i32) -> (i32, i32) {
    %c0_i32 = arith.constant 0 : i32
    %c0_i32_0 = arith.constant 0 : i32
    %c0_i32_1 = arith.constant 0 : i32
    return %c0_i32, %c0_i32_0 : i32, i32
  }
  func.func @transform_3(%arg0: i32) -> (i32, i32) {
    %c0_i32 = arith.constant 0 : i32
    %c0_i32_0 = arith.constant 0 : i32
    %c0_i32_1 = arith.constant 0 : i32
    return %c0_i32, %c0_i32_0 : i32, i32
  }
  func.func @transform_4(%arg0: i32) -> (i32, i32) {
    %c0_i32 = arith.constant 0 : i32
    %c0_i32_0 = arith.constant 0 : i32
    %c0_i32_1 = arith.constant 0 : i32
    return %c0_i32, %c0_i32_0 : i32, i32
  }
  func.func @transform_5(%arg0: i32) -> (i32, i32) {
    %c0_i32 = arith.constant 0 : i32
    %c0_i32_0 = arith.constant 0 : i32
    %c0_i32_1 = arith.constant 0 : i32
    return %c0_i32, %c0_i32_0 : i32, i32
  }
  func.func @transform_6(%arg0: i32) -> (i32, i32) {
    %c0_i32 = arith.constant 0 : i32
    %c0_i32_0 = arith.constant 0 : i32
    %c0_i32_1 = arith.constant 0 : i32
    return %c0_i32, %c0_i32_0 : i32, i32
  }
  func.func @transform_7(%arg0: i32) -> (i32, i32) {
    %c0_i32 = arith.constant 0 : i32
    %c0_i32_0 = arith.constant 0 : i32
    return %arg0, %c0_i32 : i32, i32
  }
}

</mosaic_0001>

<llo_original>
// kernel: tpu_custom_call.1
$region0: #{tpu_custom_call.1}
  #allocation0 [shape = 'u32[]', space=smem, size = 0x4, offset = 0x4, fixed_abs, tag = 'smem constant byte address 0x4 - core index']
  #allocation1 [shape = 'u32[72,128]{1,0:T(1,128)}', space=vmem, size = 0x9000, scoped, tag = 'internal scratch']
  %s0 = inlined_call_operand.hbm [shape: f32[16,128], index: 0, kind: input, shape index: {}]
  %s1 = inlined_call_operand.hbm [shape: f32[1,128], index: 1, kind: input, shape index: {}]
  %s2 = inlined_call_operand.vmem [shape: f32[1,128], index: 2, kind: input, shape index: {}]
  %s3 = inlined_call_operand.hbm [shape: bf16[128,128], index: 3, kind: input, shape index: {}]
  %s4 = inlined_call_operand.vmem [shape: f32[1,128], index: 4, kind: input, shape index: {}]
  %s5 = inlined_call_operand.hbm [shape: bf16[128,128], index: 5, kind: input, shape index: {}]
  %s6 = inlined_call_operand.vmem [shape: f32[1,128], index: 6, kind: input, shape index: {}]
  %s7 = inlined_call_operand.hbm [shape: f32[16,128], index: 7, kind: output, shape index: {}]
  %s8 = sld [smem:[#allocation0]]
  $region54: #{tpu_custom_call.1} parent=0
    _
  %s10 = ssub.s32 1, %s8
  %s11 = scalar_select 0, %s10, %s8
  $region1: #{tpu_custom_call.1} parent=0
    #allocation2 [shape = 'u8[8192]{0}', space=vmem, size = 0x2000, scoped, tag = 'input window, operand 0, single buffered']
    #allocation3 [shape = 's32[1]{0}', space=sflag, size = 0x4, scoped, tag = 'scoped memory for tpu_custom_call.1']
    #allocation4 [shape = 's32[1]{0}', space=sflag, size = 0x4, scoped, tag = 'scoped memory for tpu_custom_call.1']
    #allocation5 [shape = 'u8[512]{0}', space=vmem, size = 0x400, scoped, tag = 'input window, operand 1, single buffered']
    #allocation6 [shape = 's32[1]{0}', space=sflag, size = 0x4, scoped, tag = 'scoped memory for tpu_custom_call.1']
    #allocation7 [shape = 'u8[32768]{0}', space=vmem, size = 0x8000, scoped, tag = 'input window, operand 3, single buffered']
    #allocation8 [shape = 'u8[32768]{0}', space=vmem, size = 0x8000, scoped, tag = 'input window, operand 5, single buffered']
    #allocation9 [shape = 's32[1]{0}', space=sflag, size = 0x4, scoped, tag = 'scoped memory for tpu_custom_call.1']
    #allocation10 [shape = 'u8[8192]{0}', space=vmem, size = 0x2000, scoped, tag = 'output window, operand 0, single buffered']
    %12 = vsyncpa [#allocation3], 0
    %13 = vsyncpa [#allocation6], 0
    %14 = vsyncpa [#allocation9], 0
    %15 = vsyncpa [#allocation4], 0
    // Predicated region
    $region2: #{tpu_custom_call.1} parent=1 // pred_check
      _
    $region3: #{tpu_custom_call.1} parent=1 // pred_check_branch
      %17 = sbr.rel (0) target = $region5
    $region4: #{tpu_custom_call.1} parent=1 // pred_region
      %19 = vsyncadd [#allocation3], 0
      %s20 = sshll.u32 %s0, 4
      %s21 = int_to_ptr.hbm [resolvable:$true] %s20
      %s22 = sshll.u32 [#allocation2], 4
      %s23 = int_to_ptr.vmem [resolvable:$true] %s22
      %28 = dma.hbm_to_vmem [thread:$0]  %s21, 256, %s23, [#allocation3], 128, 128, 8
    $region5: #{tpu_custom_call.1} parent=1 // pred_fallthru
      _
    // Predicated region
    $region6: #{tpu_custom_call.1} parent=1 // pred_check
      _
    $region7: #{tpu_custom_call.1} parent=1 // pred_check_branch
      %30 = sbr.rel (0) target = $region9
    $region8: #{tpu_custom_call.1} parent=1 // pred_region
      %32 = vsyncadd [#allocation6], 0
      %s34 = sshll.u32 %s1, 4
      %s35 = int_to_ptr.hbm [resolvable:$true] %s34
      %s36 = sshll.u32 [#allocation5], 4
      %s37 = int_to_ptr.vmem [resolvable:$true] %s36
      %39 = dma.hbm_to_vmem [thread:$0]  %s35, 16, %s37, [#allocation6]
    $region9: #{tpu_custom_call.1} parent=1 // pred_fallthru
      _
    // Predicated region
    $region10: #{tpu_custom_call.1} parent=1 // pred_check
      _
    $region11: #{tpu_custom_call.1} parent=1 // pred_check_branch
      %41 = sbr.rel (0) target = $region13
    $region12: #{tpu_custom_call.1} parent=1 // pred_region
      _
    $region13: #{tpu_custom_call.1} parent=1 // pred_fallthru
      _
    // Predicated region
    $region14: #{tpu_custom_call.1} parent=1 // pred_check
      _
    $region15: #{tpu_custom_call.1} parent=1 // pred_check_branch
      %43 = sbr.rel (0) target = $region17
    $region16: #{tpu_custom_call.1} parent=1 // pred_region
      %45 = vsyncadd [#allocation6], 0
      %s46 = sshll.u32 %s3, 4
      %s47 = int_to_ptr.hbm [resolvable:$true] %s46
      %s48 = sshll.u32 [#allocation7], 4
      %s49 = int_to_ptr.vmem [resolvable:$true] %s48
      %54 = dma.hbm_to_vmem [thread:$0]  %s47, 1024, %s49, [#allocation6], 64, 64, 4
    $region17: #{tpu_custom_call.1} parent=1 // pred_fallthru
      _
    // Predicated region
    $region18: #{tpu_custom_call.1} parent=1 // pred_check
      _
    $region19: #{tpu_custom_call.1} parent=1 // pred_check_branch
      %56 = sbr.rel (0) target = $region21
    $region20: #{tpu_custom_call.1} parent=1 // pred_region
      _
    $region21: #{tpu_custom_call.1} parent=1 // pred_fallthru
      _
    // Predicated region
    $region22: #{tpu_custom_call.1} parent=1 // pred_check
      _
    $region23: #{tpu_custom_call.1} parent=1 // pred_check_branch
      %58 = sbr.rel (0) target = $region25
    $region24: #{tpu_custom_call.1} parent=1 // pred_region
      %60 = vsyncadd [#allocation9], 0
      %s61 = sshll.u32 %s5, 4
      %s62 = int_to_ptr.hbm [resolvable:$true] %s61
      %s63 = sshll.u32 [#allocation8], 4
      %s64 = int_to_ptr.vmem [resolvable:$true] %s63
      %69 = dma.hbm_to_vmem [thread:$0]  %s62, 1024, %s64, [#allocation9], 64, 64, 4
    $region25: #{tpu_custom_call.1} parent=1 // pred_fallthru
      _
    // Predicated region
    $region26: #{tpu_custom_call.1} parent=1 // pred_check
      _
    $region27: #{tpu_custom_call.1} parent=1 // pred_check_branch
      %71 = sbr.rel (0) target = $region29
    $region28: #{tpu_custom_call.1} parent=1 // pred_region
      _
    $region29: #{tpu_custom_call.1} parent=1 // pred_fallthru
      _
    // Predicated region
    $region30: #{tpu_custom_call.1} parent=1 // pred_check
      _
    $region31: #{tpu_custom_call.1} parent=1 // pred_check_branch
      %73 = sbr.rel (0) target = $region33
    $region32: #{tpu_custom_call.1} parent=1 // pred_region
      %75 = dma.done [#allocation3], 256
    $region33: #{tpu_custom_call.1} parent=1 // pred_fallthru
      _
    // Predicated region
    $region34: #{tpu_custom_call.1} parent=1 // pred_check
      _
    $region35: #{tpu_custom_call.1} parent=1 // pred_check_branch
      %77 = sbr.rel (0) target = $region37
    $region36: #{tpu_custom_call.1} parent=1 // pred_region
      %79 = dma.done [#allocation6], 16
    $region37: #{tpu_custom_call.1} parent=1 // pred_fallthru
      _
    // Predicated region
    $region38: #{tpu_custom_call.1} parent=1 // pred_check
      _
    $region39: #{tpu_custom_call.1} parent=1 // pred_check_branch
      %81 = sbr.rel (0) target = $region41
    $region40: #{tpu_custom_call.1} parent=1 // pred_region
      %83 = dma.done [#allocation6], 1024
    $region41: #{tpu_custom_call.1} parent=1 // pred_fallthru
      _
    // Predicated region
    $region42: #{tpu_custom_call.1} parent=1 // pred_check
      _
    $region43: #{tpu_custom_call.1} parent=1 // pred_check_branch
      %85 = sbr.rel (0) target = $region45
    $region44: #{tpu_custom_call.1} parent=1 // pred_region
      %87 = dma.done [#allocation9], 1024
    $region45: #{tpu_custom_call.1} parent=1 // pred_fallthru
      _
    %v88 = vld [vmem:[#allocation2] sm:$0xff]
    %v89 = vld [vmem:[#allocation2 + $0x8] sm:$0xff]
    %90 = vadd.xlane.f32.xlu0 %v88
    %v91 = vpop.xlane.xlu0 %90
    %92 = vadd.xlane.f32.xlu0 %v89
    %v93 = vpop.xlane.xlu0 %92
    %v94 = vmul.f32 %v91, 0.03125
    %v95 = vmul.f32 %v93, 0.03125
    %v96 = vsub.f32 %v88, %v94
    %v97 = vsub.f32 %v89, %v95
    %v98 = vlaneseq
    %v99 = vand.u32 %v98, 127
    %vm100 = vcmp.lt.s32.totalorder %v99, 32
    %v101 = vsel %vm100, %v96, 0.0
    %v102 = vsel %vm100, %v97, 0.0
    %v103 = vmul.f32 %v101, %v101
    %v104 = vmul.f32 %v102, %v102
    %105 = vadd.xlane.f32.xlu0 %v103
    %v106 = vpop.xlane.xlu0 %105
    %107 = vadd.xlane.f32.xlu0 %v104
    %v108 = vpop.xlane.xlu0 %107
    %v109 = vmul.f32 %v106, 0.03125
    %v110 = vmul.f32 %v108, 0.03125
    %v111 = vadd.f32 %v109, 1e-05
    %v112 = vadd.f32 %v110, 1e-05
    %v113 = vrsqrt.pop %v111
    %v114 = vmul.f32 %v113, %v111
    %v115 = vmul.f32 %v114, %v113
    %v116 = vmul.f32 0.5, %v115
    %v117 = vsub.f32 1.5, %v116
    %v118 = vmul.f32 %v113, %v117
    %vm119 = vweird.f32 %v111
    %vm120 = vweird.f32 %v113
    %vm121 = vmor %vm119, %vm120
    %v122 = vsel %vm121, %v113, %v118
    %v123 = vrsqrt.pop %v112
    %v124 = vmul.f32 %v123, %v112
    %v125 = vmul.f32 %v124, %v123
    %v126 = vmul.f32 0.5, %v125
    %v127 = vsub.f32 1.5, %v126
    %v128 = vmul.f32 %v123, %v127
    %vm129 = vweird.f32 %v112
    %vm130 = vweird.f32 %v123
    %vm131 = vmor %vm129, %vm130
    %v132 = vsel %vm131, %v123, %v128
    %v133 = vmul.f32 %v96, %v122
    %v134 = vmul.f32 %v97, %v132
    %v135 = vld [vmem:[#allocation5] sm:$0x1]
    %v137 = vperm.slane %v135, 0
    %v139 = vmul.f32 %v133, %v137
    %v140 = vmul.f32 %v134, %v137
    %v141 = vld [vmem:[%s2] sm:$0x1]
    %v143 = vperm.slane %v141, 0
    %v145 = vadd.f32 %v139, %v143
    %v146 = vadd.f32 %v140, %v143
    %v147 = vpack.c.bf16 %v146, %v145
    %v148 = vld [vmem:[#allocation7] sm:$0xf]
    %v149 = vld [vmem:[#allocation7 + $0x4] sm:$0xf]
    %v150 = vld [vmem:[#allocation7 + $0x8] sm:$0xf]
    %v151 = vld [vmem:[#allocation7 + $0xc] sm:$0xf]
    %v152 = vld [vmem:[#allocation7 + $0x10] sm:$0xf]
    %v153 = vld [vmem:[#allocation7 + $0x14] sm:$0xf]
    %v154 = vld [vmem:[#allocation7 + $0x18] sm:$0xf]
    %v155 = vld [vmem:[#allocation7 + $0x1c] sm:$0xf]
    %v156 = vld [vmem:[#allocation7 + $0x20] sm:$0xf]
    %v157 = vld [vmem:[#allocation7 + $0x24] sm:$0xf]
    %v158 = vld [vmem:[#allocation7 + $0x28] sm:$0xf]
    %v159 = vld [vmem:[#allocation7 + $0x2c] sm:$0xf]
    %v160 = vld [vmem:[#allocation7 + $0x30] sm:$0xf]
    %v161 = vld [vmem:[#allocation7 + $0x34] sm:$0xf]
    %v162 = vld [vmem:[#allocation7 + $0x38] sm:$0xf]
    %v163 = vld [vmem:[#allocation7 + $0x3c] sm:$0xf]
    %v164 = vld [vmem:[%s4] sm:$0x1]
    %v166 = vperm.slane %v164, 0
    %v184 = vunpack.c.l.b16 %v148
    %v185 = vunpack.c.l.b16 %v149
    %v186 = vunpack.c.l.b16 %v150
    %v187 = vunpack.c.l.b16 %v151
    %v188 = vunpack.c.l.b16 %v152
    %v189 = vunpack.c.l.b16 %v153
    %v190 = vunpack.c.l.b16 %v154
    %v191 = vunpack.c.l.b16 %v155
    %v192 = vunpack.c.l.b16 %v156
    %v193 = vunpack.c.l.b16 %v157
    %v194 = vunpack.c.l.b16 %v158
    %v195 = vunpack.c.l.b16 %v159
    %v196 = vunpack.c.l.b16 %v160
    %v197 = vunpack.c.l.b16 %v161
    %v198 = vunpack.c.l.b16 %v162
    %v199 = vunpack.c.l.b16 %v163
    %v200 = vpack.c.b16 %v185, %v184
    %v201 = vpack.c.b16 %v187, %v186
    %v202 = vpack.c.b16 %v189, %v188
    %v203 = vpack.c.b16 %v191, %v190
    %v204 = vpack.c.b16 %v193, %v192
    %v205 = vpack.c.b16 %v195, %v194
    %v206 = vpack.c.b16 %v197, %v196
    %v207 = vpack.c.b16 %v199, %v198
    %216 = vmatpush.bf16.msra.mxu0 %v207
    %217 = vmatpush.bf16.msra.mxu0 %v206
    %218 = vmatpush.bf16.msra.mxu0 %v205
    %219 = vmatpush.bf16.msra.mxu0 %v204
    %220 = vmatpush.bf16.msra.mxu0 %v203
    %221 = vmatpush.bf16.msra.mxu0 %v202
    %222 = vmatpush.bf16.msra.mxu0 %v201
    %223 = vmatpush.bf16.msra.mxu0 %v200
    %224 = vmatmul.bf16.gmra.mxu0 %v147
    %v225 = vpop.f32.mrf.mxu0
    %v226 = vadd.f32 %v166, %v225
    %v227 = vpop.f32.mrf.mxu0
    %v228 = vadd.f32 %v166, %v227
    %229 = vdwg.mxu0
    %v230 = vmul.f32 %v226, 0.5
    %v231 = vmul.f32 %v228, 0.5
    %v232 = vmul.f32 %v226, 0.70710677
    %v233 = vmul.f32 %v228, 0.70710677
    %v234 = vmul.f32 %v232, %v232
    %v235 = vmin.f32 16.0, %v234
    %v236 = vmul.f32 %v235, 2.1237322e-06
    %v237 = vadd.f32 %v236, 0.00028619796
    %v238 = vmul.f32 %v235, %v237
    %v239 = vadd.f32 %v238, 0.0036580483
    %v240 = vmul.f32 %v235, %v239
    %v241 = vadd.f32 %v240, 0.05243302
    %v242 = vmul.f32 %v235, %v241
    %v243 = vadd.f32 %v242, 0.18741608
    %v244 = vmul.f32 %v235, %v243
    %v245 = vadd.f32 %v244, 1.1283791
    %v246 = vmul.f32 %v232, %v245
    %v247 = vmul.f32 %v235, 3.8918573e-05
    %v248 = vadd.f32 %v247, 0.001143296
    %v249 = vmul.f32 %v235, %v248
    %v250 = vadd.f32 %v249, 0.014752088
    %v251 = vmul.f32 %v235, %v250
    %v252 = vadd.f32 %v251, 0.112945676
    %v253 = vmul.f32 %v235, %v252
    %v254 = vadd.f32 %v253, 0.4994258
    %v255 = vmul.f32 %v235, %v254
    %v256 = vadd.f32 %v255, 1.0
    %v257 = vrcp.pop %v256
    %v258 = vmul.f32 %v256, %v257
    %v259 = vsub.f32 1.0, %v258
    %v260 = vmul.f32 %v257, %v259
    %v261 = vadd.f32 %v257, %v260
    %vm262 = vweird.f32 %v256
    %vm263 = vweird.f32 %v257
    %vm264 = vmor %vm262, %vm263
    %v265 = vsel %vm264, %v257, %v261
    %v266 = vand.u32 2147483647, %v256
    %vm267 = vcmp.eq.f32.partialorder %v266, 8.507059e+37
    %v268 = vand.u32 %v256, 2147483648
    %v269 = vor.u32 1.1754944e-38, %v268
    %v270 = vsel %vm267, %v269, %v265
    %v271 = vmul.f32 %v246, %v270
    %v272 = vmin.f32 %v271, 1.0
    %v273 = vmax.f32 %v272, -1.0
    %v274 = vmul.f32 %v233, %v233
    %v275 = vmin.f32 16.0, %v274
    %v276 = vmul.f32 %v275, 2.1237322e-06
    %v277 = vadd.f32 %v276, 0.00028619796
    %v278 = vmul.f32 %v275, %v277
    %v279 = vadd.f32 %v278, 0.0036580483
    %v280 = vmul.f32 %v275, %v279
    %v281 = vadd.f32 %v280, 0.05243302
    %v282 = vmul.f32 %v275, %v281
    %v283 = vadd.f32 %v282, 0.18741608
    %v284 = vmul.f32 %v275, %v283
    %v285 = vadd.f32 %v284, 1.1283791
    %v286 = vmul.f32 %v233, %v285
    %v287 = vmul.f32 %v275, 3.8918573e-05
    %v288 = vadd.f32 %v287, 0.001143296
    %v289 = vmul.f32 %v275, %v288
    %v290 = vadd.f32 %v289, 0.014752088
    %v291 = vmul.f32 %v275, %v290
    %v292 = vadd.f32 %v291, 0.112945676
    %v293 = vmul.f32 %v275, %v292
    %v294 = vadd.f32 %v293, 0.4994258
    %v295 = vmul.f32 %v275, %v294
    %v296 = vadd.f32 %v295, 1.0
    %v297 = vrcp.pop %v296
    %v298 = vmul.f32 %v296, %v297
    %v299 = vsub.f32 1.0, %v298
    %v300 = vmul.f32 %v297, %v299
    %v301 = vadd.f32 %v297, %v300
    %vm302 = vweird.f32 %v296
    %vm303 = vweird.f32 %v297
    %vm304 = vmor %vm302, %vm303
    %v305 = vsel %vm304, %v297, %v301
    %v306 = vand.u32 2147483647, %v296
    %vm307 = vcmp.eq.f32.partialorder %v306, 8.507059e+37
    %v308 = vand.u32 %v296, 2147483648
    %v309 = vor.u32 1.1754944e-38, %v308
    %v310 = vsel %vm307, %v309, %v305
    %v311 = vmul.f32 %v286, %v310
    %v312 = vmin.f32 %v311, 1.0
    %v313 = vmax.f32 %v312, -1.0
    %v314 = vadd.f32 %v273, 1.0
    %v315 = vadd.f32 %v313, 1.0
    %v316 = vmul.f32 %v230, %v314
    %v317 = vmul.f32 %v231, %v315
    %v318 = vpack.c.bf16 %v317, %v316
    %v319 = vld [vmem:[#allocation8] sm:$0xf]
    %v320 = vld [vmem:[#allocation8 + $0x4] sm:$0xf]
    %v321 = vld [vmem:[#allocation8 + $0x8] sm:$0xf]
    %v322 = vld [vmem:[#allocation8 + $0xc] sm:$0xf]
    %v323 = vld [vmem:[#allocation8 + $0x10] sm:$0xf]
    %v324 = vld [vmem:[#allocation8 + $0x14] sm:$0xf]
    %v325 = vld [vmem:[#allocation8 + $0x18] sm:$0xf]
    %v326 = vld [vmem:[#allocation8 + $0x1c] sm:$0xf]
    %v327 = vld [vmem:[#allocation8 + $0x20] sm:$0xf]
    %v328 = vld [vmem:[#allocation8 + $0x24] sm:$0xf]
    %v329 = vld [vmem:[#allocation8 + $0x28] sm:$0xf]
    %v330 = vld [vmem:[#allocation8 + $0x2c] sm:$0xf]
    %v331 = vld [vmem:[#allocation8 + $0x30] sm:$0xf]
    %v332 = vld [vmem:[#allocation8 + $0x34] sm:$0xf]
    %v333 = vld [vmem:[#allocation8 + $0x38] sm:$0xf]
    %v334 = vld [vmem:[#allocation8 + $0x3c] sm:$0xf]
    %v335 = vld [vmem:[%s6] sm:$0x1]
    %v337 = vperm.slane %v335, 0
    %v355 = vunpack.c.l.b16 %v319
    %v356 = vunpack.c.l.b16 %v320
    %v357 = vunpack.c.l.b16 %v321
    %v358 = vunpack.c.l.b16 %v322
    %v359 = vunpack.c.l.b16 %v323
    %v360 = vunpack.c.l.b16 %v324
    %v361 = vunpack.c.l.b16 %v325
    %v362 = vunpack.c.l.b16 %v326
    %v363 = vunpack.c.l.b16 %v327
    %v364 = vunpack.c.l.b16 %v328
    %v365 = vunpack.c.l.b16 %v329
    %v366 = vunpack.c.l.b16 %v330
    %v367 = vunpack.c.l.b16 %v331
    %v368 = vunpack.c.l.b16 %v332
    %v369 = vunpack.c.l.b16 %v333
    %v370 = vunpack.c.l.b16 %v334
    %v371 = vpack.c.b16 %v356, %v355
    %v372 = vpack.c.b16 %v358, %v357
    %v373 = vpack.c.b16 %v360, %v359
    %v374 = vpack.c.b16 %v362, %v361
    %v375 = vpack.c.b16 %v364, %v363
    %v376 = vpack.c.b16 %v366, %v365
    %v377 = vpack.c.b16 %v368, %v367
    %v378 = vpack.c.b16 %v370, %v369
    %387 = vmatpush.bf16.msra.mxu0 %v378
    %388 = vmatpush.bf16.msra.mxu0 %v377
    %389 = vmatpush.bf16.msra.mxu0 %v376
    %390 = vmatpush.bf16.msra.mxu0 %v375
    %391 = vmatpush.bf16.msra.mxu0 %v374
    %392 = vmatpush.bf16.msra.mxu0 %v373
    %393 = vmatpush.bf16.msra.mxu0 %v372
    %394 = vmatpush.bf16.msra.mxu0 %v371
    %395 = vmatmul.bf16.gmra.mxu0 %v318
    %v396 = vpop.f32.mrf.mxu0
    %v397 = vadd.f32 %v337, %v396
    %v398 = vpop.f32.mrf.mxu0
    %v399 = vadd.f32 %v337, %v398
    %400 = vdwg.mxu0
    %401 = vst [vmem:[#allocation10] sm:$0xff] %v397
    %402 = vst [vmem:[#allocation10 + $0x8] sm:$0xff] %v399
    // Predicated region
    $region46: #{tpu_custom_call.1} parent=1 // pred_check
      _
    $region47: #{tpu_custom_call.1} parent=1 // pred_check_branch
      %404 = sbr.rel (0) target = $region49
    $region48: #{tpu_custom_call.1} parent=1 // pred_region
      %406 = vsyncadd [#allocation4], 0
      %s407 = sshll.u32 [#allocation10], 4
      %s408 = int_to_ptr.vmem [resolvable:$true] %s407
      %s409 = sshll.u32 %s7, 4
      %s410 = int_to_ptr.hbm [resolvable:$true] %s409
      %415 = dma.vmem_to_hbm [thread:$0]  %s408, 256, %s410, [#allocation4], 128, 128, 8
    $region49: #{tpu_custom_call.1} parent=1 // pred_fallthru
      _
    // Predicated region
    $region50: #{tpu_custom_call.1} parent=1 // pred_check
      _
    $region51: #{tpu_custom_call.1} parent=1 // pred_check_branch
      %417 = sbr.rel (0) target = $region53
    $region52: #{tpu_custom_call.1} parent=1 // pred_region
      %419 = dma.done [#allocation4], 256
    $region53: #{tpu_custom_call.1} parent=1 // pred_fallthru
      _
    %420 = vsyncpa [#allocation3], 1
    %421 = vsyncpa [#allocation6], 1
    %422 = vsyncpa [#allocation9], 1
    %423 = vsyncpa [#allocation4], 1

// kernel: tpu_custom_call.1
$region0: #{tpu_custom_call.1}
  #allocation0 [shape = 'u32[]', space=smem, size = 0x4, offset = 0x4, fixed_abs, tag = 'smem constant byte address 0x4 - core index']
  #allocation1 [shape = 'u32[72,128]{1,0:T(1,128)}', space=vmem, size = 0x9000, scoped, tag = 'internal scratch']
  %s0 = inlined_call_operand.hbm [shape: f32[16,128], index: 0, kind: input, shape index: {}]
  %s1 = inlined_call_operand.hbm [shape: f32[1,128], index: 1, kind: input, shape index: {}]
  %s2 = inlined_call_operand.vmem [shape: f32[1,128], index: 2, kind: input, shape index: {}]
  %s3 = inlined_call_operand.hbm [shape: bf16[128,128], index: 3, kind: input, shape index: {}]
  %s4 = inlined_call_operand.vmem [shape: f32[1,128], index: 4, kind: input, shape index: {}]
  %s5 = inlined_call_operand.hbm [shape: bf16[128,128], index: 5, kind: input, shape index: {}]
  %s6 = inlined_call_operand.vmem [shape: f32[1,128], index: 6, kind: input, shape index: {}]
  %s7 = inlined_call_operand.hbm [shape: f32[16,128], index: 7, kind: output, shape index: {}]
  %s8 = sld [smem:[#allocation0]]
  $region54: #{tpu_custom_call.1} parent=0
    _
  %s10 = ssub.s32 1, %s8
  %s11 = scalar_select 0, %s10, %s8
  $region1: #{tpu_custom_call.1} parent=0
    #allocation2 [shape = 'u8[8192]{0}', space=vmem, size = 0x2000, scoped, tag = 'input window, operand 0, single buffered']
    #allocation3 [shape = 's32[1]{0}', space=sflag, size = 0x4, scoped, tag = 'scoped memory for tpu_custom_call.1']
    #allocation4 [shape = 's32[1]{0}', space=sflag, size = 0x4, scoped, tag = 'scoped memory for tpu_custom_call.1']
    #allocation5 [shape = 'u8[512]{0}', space=vmem, size = 0x400, scoped, tag = 'input window, operand 1, single buffered']
    #allocation6 [shape = 's32[1]{0}', space=sflag, size = 0x4, scoped, tag = 'scoped memory for tpu_custom_call.1']
    #allocation7 [shape = 'u8[32768]{0}', space=vmem, size = 0x8000, scoped, tag = 'input window, operand 3, single buffered']
    #allocation8 [shape = 'u8[32768]{0}', space=vmem, size = 0x8000, scoped, tag = 'input window, operand 5, single buffered']
    #allocation9 [shape = 's32[1]{0}', space=sflag, size = 0x4, scoped, tag = 'scoped memory for tpu_custom_call.1']
    #allocation10 [shape = 'u8[8192]{0}', space=vmem, size = 0x2000, scoped, tag = 'output window, operand 0, single buffered']
    %12 = vsyncpa [#allocation3], 0
    %13 = vsyncpa [#allocation6], 0
    %14 = vsyncpa [#allocation9], 0
    %15 = vsyncpa [#allocation4], 0
    // Predicated region
    $region2: #{tpu_custom_call.1} parent=1 // pred_check
      _
    $region3: #{tpu_custom_call.1} parent=1 // pred_check_branch
      %17 = sbr.rel (0) target = $region5
    $region4: #{tpu_custom_call.1} parent=1 // pred_region
      %19 = vsyncadd [#allocation3], 0
      %s20 = sshll.u32 %s0, 4
      %s21 = int_to_ptr.hbm [resolvable:$true] %s20
      %s22 = sshll.u32 [#allocation2], 4
      %s23 = int_to_ptr.vmem [resolvable:$true] %s22
      %28 = dma.hbm_to_vmem [thread:$0]  %s21, 256, %s23, [#allocation3], 128, 128, 8
    $region5: #{tpu_custom_call.1} parent=1 // pred_fallthru
      _
    // Predicated region
    $region6: #{tpu_custom_call.1} parent=1 // pred_check
      _
    $region7: #{tpu_custom_call.1} parent=1 // pred_check_branch
      %30 = sbr.rel (0) target = $region9
    $region8: #{tpu_custom_call.1} parent=1 // pred_region
      %32 = vsyncadd [#allocation6], 0
      %s34 = sshll.u32 %s1, 4
      %s35 = int_to_ptr.hbm [resolvable:$true] %s34
      %s36 = sshll.u32 [#allocation5], 4
      %s37 = int_to_ptr.vmem [resolvable:$true] %s36
      %39 = dma.hbm_to_vmem [thread:$0]  %s35, 16, %s37, [#allocation6]
    $region9: #{tpu_custom_call.1} parent=1 // pred_fallthru
      _
    // Predicated region
    $region10: #{tpu_custom_call.1} parent=1 // pred_check
      _
    $region11: #{tpu_custom_call.1} parent=1 // pred_check_branch
      %41 = sbr.rel (0) target = $region13
    $region12: #{tpu_custom_call.1} parent=1 // pred_region
      _
    $region13: #{tpu_custom_call.1} parent=1 // pred_fallthru
      _
    // Predicated region
    $region14: #{tpu_custom_call.1} parent=1 // pred_check
      _
    $region15: #{tpu_custom_call.1} parent=1 // pred_check_branch
      %43 = sbr.rel (0) target = $region17
    $region16: #{tpu_custom_call.1} parent=1 // pred_region
      %45 = vsyncadd [#allocation6], 0
      %s46 = sshll.u32 %s3, 4
      %s47 = int_to_ptr.hbm [resolvable:$true] %s46
      %s48 = sshll.u32 [#allocation7], 4
      %s49 = int_to_ptr.vmem [resolvable:$true] %s48
      %54 = dma.hbm_to_vmem [thread:$0]  %s47, 1024, %s49, [#allocation6], 64, 64, 4
    $region17: #{tpu_custom_call.1} parent=1 // pred_fallthru
      _
    // Predicated region
    $region18: #{tpu_custom_call.1} parent=1 // pred_check
      _
    $region19: #{tpu_custom_call.1} parent=1 // pred_check_branch
      %56 = sbr.rel (0) target = $region21
    $region20: #{tpu_custom_call.1} parent=1 // pred_region
      _
    $region21: #{tpu_custom_call.1} parent=1 // pred_fallthru
      _
    // Predicated region
    $region22: #{tpu_custom_call.1} parent=1 // pred_check
      _
    $region23: #{tpu_custom_call.1} parent=1 // pred_check_branch
      %58 = sbr.rel (0) target = $region25
    $region24: #{tpu_custom_call.1} parent=1 // pred_region
      %60 = vsyncadd [#allocation9], 0
      %s61 = sshll.u32 %s5, 4
      %s62 = int_to_ptr.hbm [resolvable:$true] %s61
      %s63 = sshll.u32 [#allocation8], 4
      %s64 = int_to_ptr.vmem [resolvable:$true] %s63
      %69 = dma.hbm_to_vmem [thread:$0]  %s62, 1024, %s64, [#allocation9], 64, 64, 4
    $region25: #{tpu_custom_call.1} parent=1 // pred_fallthru
      _
    // Predicated region
    $region26: #{tpu_custom_call.1} parent=1 // pred_check
      _
    $region27: #{tpu_custom_call.1} parent=1 // pred_check_branch
      %71 = sbr.rel (0) target = $region29
    $region28: #{tpu_custom_call.1} parent=1 // pred_region
      _
    $region29: #{tpu_custom_call.1} parent=1 // pred_fallthru
      _
    // Predicated region
    $region30: #{tpu_custom_call.1} parent=1 // pred_check
      _
    $region31: #{tpu_custom_call.1} parent=1 // pred_check_branch
      %73 = sbr.rel (0) target = $region33
    $region32: #{tpu_custom_call.1} parent=1 // pred_region
      %75 = dma.done [#allocation3], 256
    $region33: #{tpu_custom_call.1} parent=1 // pred_fallthru
      _
    // Predicated region
    $region34: #{tpu_custom_call.1} parent=1 // pred_check
      _
    $region35: #{tpu_custom_call.1} parent=1 // pred_check_branch
      %77 = sbr.rel (0) target = $region37
    $region36: #{tpu_custom_call.1} parent=1 // pred_region
      %79 = dma.done [#allocation6], 16
    $region37: #{tpu_custom_call.1} parent=1 // pred_fallthru
      _
    // Predicated region
    $region38: #{tpu_custom_call.1} parent=1 // pred_check
      _
    $region39: #{tpu_custom_call.1} parent=1 // pred_check_branch
      %81 = sbr.rel (0) target = $region41
    $region40: #{tpu_custom_call.1} parent=1 // pred_region
      %83 = dma.done [#allocation6], 1024
    $region41: #{tpu_custom_call.1} parent=1 // pred_fallthru
      _
    // Predicated region
    $region42: #{tpu_custom_call.1} parent=1 // pred_check
      _
    $region43: #{tpu_custom_call.1} parent=1 // pred_check_branch
      %85 = sbr.rel (0) target = $region45
    $region44: #{tpu_custom_call.1} parent=1 // pred_region
      %87 = dma.done [#allocation9], 1024
    $region45: #{tpu_custom_call.1} parent=1 // pred_fallthru
      _
    %v88 = vld [vmem:[#allocation2] sm:$0xff]
    %v89 = vld [vmem:[#allocation2 + $0x8] sm:$0xff]
    %90 = vadd.xlane.f32.xlu0 %v88
    %v91 = vpop.xlane.xlu0 %90
    %92 = vadd.xlane.f32.xlu0 %v89
    %v93 = vpop.xlane.xlu0 %92
    %v94 = vmul.f32 %v91, 0.03125
    %v95 = vmul.f32 %v93, 0.03125
    %v96 = vsub.f32 %v88, %v94
    %v97 = vsub.f32 %v89, %v95
    %v98 = vlaneseq
    %v99 = vand.u32 %v98, 127
    %vm100 = vcmp.lt.s32.totalorder %v99, 32
    %v101 = vsel %vm100, %v96, 0.0
    %v102 = vsel %vm100, %v97, 0.0
    %v103 = vmul.f32 %v101, %v101
    %v104 = vmul.f32 %v102, %v102
    %105 = vadd.xlane.f32.xlu0 %v103
    %v106 = vpop.xlane.xlu0 %105
    %107 = vadd.xlane.f32.xlu0 %v104
    %v108 = vpop.xlane.xlu0 %107
    %v109 = vmul.f32 %v106, 0.03125
    %v110 = vmul.f32 %v108, 0.03125
    %v111 = vadd.f32 %v109, 1e-05
    %v112 = vadd.f32 %v110, 1e-05
    %v113 = vrsqrt.pop %v111
    %v114 = vmul.f32 %v113, %v111
    %v115 = vmul.f32 %v114, %v113
    %v116 = vmul.f32 0.5, %v115
    %v117 = vsub.f32 1.5, %v116
    %v118 = vmul.f32 %v113, %v117
    %vm119 = vweird.f32 %v111
    %vm120 = vweird.f32 %v113
    %vm121 = vmor %vm119, %vm120
    %v122 = vsel %vm121, %v113, %v118
    %v123 = vrsqrt.pop %v112
    %v124 = vmul.f32 %v123, %v112
    %v125 = vmul.f32 %v124, %v123
    %v126 = vmul.f32 0.5, %v125
    %v127 = vsub.f32 1.5, %v126
    %v128 = vmul.f32 %v123, %v127
    %vm129 = vweird.f32 %v112
    %vm130 = vweird.f32 %v123
    %vm131 = vmor %vm129, %vm130
    %v132 = vsel %vm131, %v123, %v128
    %v133 = vmul.f32 %v96, %v122
    %v134 = vmul.f32 %v97, %v132
    %v135 = vld [vmem:[#allocation5] sm:$0x1]
    %v137 = vperm.slane %v135, 0
    %v139 = vmul.f32 %v133, %v137
    %v140 = vmul.f32 %v134, %v137
    %v141 = vld [vmem:[%s2] sm:$0x1]
    %v143 = vperm.slane %v141, 0
    %v145 = vadd.f32 %v139, %v143
    %v146 = vadd.f32 %v140, %v143
    %v147 = vpack.c.bf16 %v146, %v145
    %v148 = vld [vmem:[#allocation7] sm:$0xf]
    %v149 = vld [vmem:[#allocation7 + $0x4] sm:$0xf]
    %v150 = vld [vmem:[#allocation7 + $0x8] sm:$0xf]
    %v151 = vld [vmem:[#allocation7 + $0xc] sm:$0xf]
    %v152 = vld [vmem:[#allocation7 + $0x10] sm:$0xf]
    %v153 = vld [vmem:[#allocation7 + $0x14] sm:$0xf]
    %v154 = vld [vmem:[#allocation7 + $0x18] sm:$0xf]
    %v155 = vld [vmem:[#allocation7 + $0x1c] sm:$0xf]
    %v156 = vld [vmem:[#allocation7 + $0x20] sm:$0xf]
    %v157 = vld [vmem:[#allocation7 + $0x24] sm:$0xf]
    %v158 = vld [vmem:[#allocation7 + $0x28] sm:$0xf]
    %v159 = vld [vmem:[#allocation7 + $0x2c] sm:$0xf]
    %v160 = vld [vmem:[#allocation7 + $0x30] sm:$0xf]
    %v161 = vld [vmem:[#allocation7 + $0x34] sm:$0xf]
    %v162 = vld [vmem:[#allocation7 + $0x38] sm:$0xf]
    %v163 = vld [vmem:[#allocation7 + $0x3c] sm:$0xf]
    %v164 = vld [vmem:[%s4] sm:$0x1]
    %v166 = vperm.slane %v164, 0
    %v184 = vunpack.c.l.b16 %v148
    %v185 = vunpack.c.l.b16 %v149
    %v186 = vunpack.c.l.b16 %v150
    %v187 = vunpack.c.l.b16 %v151
    %v188 = vunpack.c.l.b16 %v152
    %v189 = vunpack.c.l.b16 %v153
    %v190 = vunpack.c.l.b16 %v154
    %v191 = vunpack.c.l.b16 %v155
    %v192 = vunpack.c.l.b16 %v156
    %v193 = vunpack.c.l.b16 %v157
    %v194 = vunpack.c.l.b16 %v158
    %v195 = vunpack.c.l.b16 %v159
    %v196 = vunpack.c.l.b16 %v160
    %v197 = vunpack.c.l.b16 %v161
    %v198 = vunpack.c.l.b16 %v162
    %v199 = vunpack.c.l.b16 %v163
    %v200 = vpack.c.b16 %v185, %v184
    %v201 = vpack.c.b16 %v187, %v186
    %v202 = vpack.c.b16 %v189, %v188
    %v203 = vpack.c.b16 %v191, %v190
    %v204 = vpack.c.b16 %v193, %v192
    %v205 = vpack.c.b16 %v195, %v194
    %v206 = vpack.c.b16 %v197, %v196
    %v207 = vpack.c.b16 %v199, %v198
    %216 = vmatpush.bf16.msra.mxu0 %v207
    %217 = vmatpush.bf16.msra.mxu0 %v206
    %218 = vmatpush.bf16.msra.mxu0 %v205
    %219 = vmatpush.bf16.msra.mxu0 %v204
    %220 = vmatpush.bf16.msra.mxu0 %v203
    %221 = vmatpush.bf16.msra.mxu0 %v202
    %222 = vmatpush.bf16.msra.mxu0 %v201
    %223 = vmatpush.bf16.msra.mxu0 %v200
    %224 = vmatmul.bf16.gmra.mxu0 %v147
    %v225 = vpop.f32.mrf.mxu0
    %v226 = vadd.f32 %v166, %v225
    %v227 = vpop.f32.mrf.mxu0
    %v228 = vadd.f32 %v166, %v227
    %229 = vdwg.mxu0
    %v230 = vmul.f32 %v226, 0.5
    %v231 = vmul.f32 %v228, 0.5
    %v232 = vmul.f32 %v226, 0.70710677
    %v233 = vmul.f32 %v228, 0.70710677
    %v234 = vmul.f32 %v232, %v232
    %v235 = vmin.f32 16.0, %v234
    %v236 = vmul.f32 %v235, 2.1237322e-06
    %v237 = vadd.f32 %v236, 0.00028619796
    %v238 = vmul.f32 %v235, %v237
    %v239 = vadd.f32 %v238, 0.0036580483
    %v240 = vmul.f32 %v235, %v239
    %v241 = vadd.f32 %v240, 0.05243302
    %v242 = vmul.f32 %v235, %v241
    %v243 = vadd.f32 %v242, 0.18741608
    %v244 = vmul.f32 %v235, %v243
    %v245 = vadd.f32 %v244, 1.1283791
    %v246 = vmul.f32 %v232, %v245
    %v247 = vmul.f32 %v235, 3.8918573e-05
    %v248 = vadd.f32 %v247, 0.001143296
    %v249 = vmul.f32 %v235, %v248
    %v250 = vadd.f32 %v249, 0.014752088
    %v251 = vmul.f32 %v235, %v250
    %v252 = vadd.f32 %v251, 0.112945676
    %v253 = vmul.f32 %v235, %v252
    %v254 = vadd.f32 %v253, 0.4994258
    %v255 = vmul.f32 %v235, %v254
    %v256 = vadd.f32 %v255, 1.0
    %v257 = vrcp.pop %v256
    %v258 = vmul.f32 %v256, %v257
    %v259 = vsub.f32 1.0, %v258
    %v260 = vmul.f32 %v257, %v259
    %v261 = vadd.f32 %v257, %v260
    %vm262 = vweird.f32 %v256
    %vm263 = vweird.f32 %v257
    %vm264 = vmor %vm262, %vm263
    %v265 = vsel %vm264, %v257, %v261
    %v266 = vand.u32 2147483647, %v256
    %vm267 = vcmp.eq.f32.partialorder %v266, 8.507059e+37
    %v268 = vand.u32 %v256, 2147483648
    %v269 = vor.u32 1.1754944e-38, %v268
    %v270 = vsel %vm267, %v269, %v265
    %v271 = vmul.f32 %v246, %v270
    %v272 = vmin.f32 %v271, 1.0
    %v273 = vmax.f32 %v272, -1.0
    %v274 = vmul.f32 %v233, %v233
    %v275 = vmin.f32 16.0, %v274
    %v276 = vmul.f32 %v275, 2.1237322e-06
    %v277 = vadd.f32 %v276, 0.00028619796
    %v278 = vmul.f32 %v275, %v277
    %v279 = vadd.f32 %v278, 0.0036580483
    %v280 = vmul.f32 %v275, %v279
    %v281 = vadd.f32 %v280, 0.05243302
    %v282 = vmul.f32 %v275, %v281
    %v283 = vadd.f32 %v282, 0.18741608
    %v284 = vmul.f32 %v275, %v283
    %v285 = vadd.f32 %v284, 1.1283791
    %v286 = vmul.f32 %v233, %v285
    %v287 = vmul.f32 %v275, 3.8918573e-05
    %v288 = vadd.f32 %v287, 0.001143296
    %v289 = vmul.f32 %v275, %v288
    %v290 = vadd.f32 %v289, 0.014752088
    %v291 = vmul.f32 %v275, %v290
    %v292 = vadd.f32 %v291, 0.112945676
    %v293 = vmul.f32 %v275, %v292
    %v294 = vadd.f32 %v293, 0.4994258
    %v295 = vmul.f32 %v275, %v294
    %v296 = vadd.f32 %v295, 1.0
    %v297 = vrcp.pop %v296
    %v298 = vmul.f32 %v296, %v297
    %v299 = vsub.f32 1.0, %v298
    %v300 = vmul.f32 %v297, %v299
    %v301 = vadd.f32 %v297, %v300
    %vm302 = vweird.f32 %v296
    %vm303 = vweird.f32 %v297
    %vm304 = vmor %vm302, %vm303
    %v305 = vsel %vm304, %v297, %v301
    %v306 = vand.u32 2147483647, %v296
    %vm307 = vcmp.eq.f32.partialorder %v306, 8.507059e+37
    %v308 = vand.u32 %v296, 2147483648
    %v309 = vor.u32 1.1754944e-38, %v308
    %v310 = vsel %vm307, %v309, %v305
    %v311 = vmul.f32 %v286, %v310
    %v312 = vmin.f32 %v311, 1.0
    %v313 = vmax.f32 %v312, -1.0
    %v314 = vadd.f32 %v273, 1.0
    %v315 = vadd.f32 %v313, 1.0
    %v316 = vmul.f32 %v230, %v314
    %v317 = vmul.f32 %v231, %v315
    %v318 = vpack.c.bf16 %v317, %v316
    %v319 = vld [vmem:[#allocation8] sm:$0xf]
    %v320 = vld [vmem:[#allocation8 + $0x4] sm:$0xf]
    %v321 = vld [vmem:[#allocation8 + $0x8] sm:$0xf]
    %v322 = vld [vmem:[#allocation8 + $0xc] sm:$0xf]
    %v323 = vld [vmem:[#allocation8 + $0x10] sm:$0xf]
    %v324 = vld [vmem:[#allocation8 + $0x14] sm:$0xf]
    %v325 = vld [vmem:[#allocation8 + $0x18] sm:$0xf]
    %v326 = vld [vmem:[#allocation8 + $0x1c] sm:$0xf]
    %v327 = vld [vmem:[#allocation8 + $0x20] sm:$0xf]
    %v328 = vld [vmem:[#allocation8 + $0x24] sm:$0xf]
    %v329 = vld [vmem:[#allocation8 + $0x28] sm:$0xf]
    %v330 = vld [vmem:[#allocation8 + $0x2c] sm:$0xf]
    %v331 = vld [vmem:[#allocation8 + $0x30] sm:$0xf]
    %v332 = vld [vmem:[#allocation8 + $0x34] sm:$0xf]
    %v333 = vld [vmem:[#allocation8 + $0x38] sm:$0xf]
    %v334 = vld [vmem:[#allocation8 + $0x3c] sm:$0xf]
    %v335 = vld [vmem:[%s6] sm:$0x1]
    %v337 = vperm.slane %v335, 0
    %v355 = vunpack.c.l.b16 %v319
    %v356 = vunpack.c.l.b16 %v320
    %v357 = vunpack.c.l.b16 %v321
    %v358 = vunpack.c.l.b16 %v322
    %v359 = vunpack.c.l.b16 %v323
    %v360 = vunpack.c.l.b16 %v324
    %v361 = vunpack.c.l.b16 %v325
    %v362 = vunpack.c.l.b16 %v326
    %v363 = vunpack.c.l.b16 %v327
    %v364 = vunpack.c.l.b16 %v328
    %v365 = vunpack.c.l.b16 %v329
    %v366 = vunpack.c.l.b16 %v330
    %v367 = vunpack.c.l.b16 %v331
    %v368 = vunpack.c.l.b16 %v332
    %v369 = vunpack.c.l.b16 %v333
    %v370 = vunpack.c.l.b16 %v334
    %v371 = vpack.c.b16 %v356, %v355
    %v372 = vpack.c.b16 %v358, %v357
    %v373 = vpack.c.b16 %v360, %v359
    %v374 = vpack.c.b16 %v362, %v361
    %v375 = vpack.c.b16 %v364, %v363
    %v376 = vpack.c.b16 %v366, %v365
    %v377 = vpack.c.b16 %v368, %v367
    %v378 = vpack.c.b16 %v370, %v369
    %387 = vmatpush.bf16.msra.mxu0 %v378
    %388 = vmatpush.bf16.msra.mxu0 %v377
    %389 = vmatpush.bf16.msra.mxu0 %v376
    %390 = vmatpush.bf16.msra.mxu0 %v375
    %391 = vmatpush.bf16.msra.mxu0 %v374
    %392 = vmatpush.bf16.msra.mxu0 %v373
    %393 = vmatpush.bf16.msra.mxu0 %v372
    %394 = vmatpush.bf16.msra.mxu0 %v371
    %395 = vmatmul.bf16.gmra.mxu0 %v318
    %v396 = vpop.f32.mrf.mxu0
    %v397 = vadd.f32 %v337, %v396
    %v398 = vpop.f32.mrf.mxu0
    %v399 = vadd.f32 %v337, %v398
    %400 = vdwg.mxu0
    %401 = vst [vmem:[#allocation10] sm:$0xff] %v397
    %402 = vst [vmem:[#allocation10 + $0x8] sm:$0xff] %v399
    // Predicated region
    $region46: #{tpu_custom_call.1} parent=1 // pred_check
      _
    $region47: #{tpu_custom_call.1} parent=1 // pred_check_branch
      %404 = sbr.rel (0) target = $region49
    $region48: #{tpu_custom_call.1} parent=1 // pred_region
      %406 = vsyncadd [#allocation4], 0
      %s407 = sshll.u32 [#allocation10], 4
      %s408 = int_to_ptr.vmem [resolvable:$true] %s407
      %s409 = sshll.u32 %s7, 4
      %s410 = int_to_ptr.hbm [resolvable:$true] %s409
      %415 = dma.vmem_to_hbm [thread:$0]  %s408, 256, %s410, [#allocation4], 128, 128, 8
    $region49: #{tpu_custom_call.1} parent=1 // pred_fallthru
      _
    // Predicated region
    $region50: #{tpu_custom_call.1} parent=1 // pred_check
      _
    $region51: #{tpu_custom_call.1} parent=1 // pred_check_branch
      %417 = sbr.rel (0) target = $region53
    $region52: #{tpu_custom_call.1} parent=1 // pred_region
      %419 = dma.done [#allocation4], 256
    $region53: #{tpu_custom_call.1} parent=1 // pred_fallthru
      _
    %420 = vsyncpa [#allocation3], 1
    %421 = vsyncpa [#allocation6], 1
    %422 = vsyncpa [#allocation9], 1
    %423 = vsyncpa [#allocation4], 1

</llo_original>
